<compile_context>
chip_gen: v6e
topology: v6e:2x2x1
jax: 0.10.0
libtpu: 0.0.40
codegen_flags: <defaults>
</compile_context>

<pallas_src>
import functools

import jax
import jax.numpy as jnp
from jax.experimental import pallas as pl
from jax.experimental.pallas import tpu as pltpu


# ---------------------------------------------------------------------------
# Fused AE-encoder kernel: 4 linears + 3 LeakyReLU(0.2), all in VMEM.
# ---------------------------------------------------------------------------
def _ae_encoder_kernel(x_ref,
                       w1_ref, b1_ref,
                       w2_ref, b2_ref,
                       w3_ref, b3_ref,
                       wz_ref, bz_ref,
                       o_ref):
    def leaky_linear(h, w_ref, b_ref):
        y = jnp.dot(h, w_ref[...], preferred_element_type=jnp.float32)
        y = y + b_ref[...]
        # LeakyReLU(0.2): max(y, 0.2*y) == y if y>=0 else 0.2*y
        return jnp.maximum(y, 0.2 * y)

    h = leaky_linear(x_ref[...], w1_ref, b1_ref)
    h = leaky_linear(h, w2_ref, b2_ref)
    h = leaky_linear(h, w3_ref, b3_ref)
    z_ae = jnp.dot(h, wz_ref[...], preferred_element_type=jnp.float32) + bz_ref[...]
    o_ref[...] = z_ae.astype(o_ref.dtype)


def ae_encoder_forward(x, params, *, block_rows=128):
    """Fused AE_encoder forward.  x: (N, n_input) float32."""
    n, n_input = x.shape
    n_z = params["z_w"].shape[1]

    # Row tile: use block_rows when it divides N, otherwise one full-N tile
    # (block equal to full array dims is always legal).
    tm = block_rows if (n % block_rows == 0) else n
    grid = (n // tm,)

    def full_spec(arr):
        # Whole array resident in VMEM, same block for every grid step.
        return pl.BlockSpec(arr.shape, lambda i: tuple(0 for _ in arr.shape))

    w1, b1 = params["enc_1_w"], params["enc_1_b"].reshape(1, -1)
    w2, b2 = params["enc_2_w"], params["enc_2_b"].reshape(1, -1)
    w3, b3 = params["enc_3_w"], params["enc_3_b"].reshape(1, -1)
    wz, bz = params["z_w"], params["z_b"].reshape(1, -1)

    return pl.pallas_call(
        _ae_encoder_kernel,
        out_shape=jax.ShapeDtypeStruct((n, n_z), jnp.float32),
        grid_spec=pltpu.PrefetchScalarGridSpec(
            num_scalar_prefetch=0,
            grid=grid,
            in_specs=[
                pl.BlockSpec((tm, n_input), lambda i: (i, 0)),   # x (row-tiled)
                full_spec(w1), full_spec(b1),
                full_spec(w2), full_spec(b2),
                full_spec(w3), full_spec(b3),
                full_spec(wz), full_spec(bz),
            ],
            out_specs=pl.BlockSpec((tm, n_z), lambda i: (i, 0)),
        ),
        compiler_params=pltpu.CompilerParams(
            dimension_semantics=("parallel",),   # shards row-tiles across TCs on v7x
        ),
    )(x, w1, b1, w2, b2, w3, b3, wz, bz)


# ---------------------------------------------------------------------------
# Parameter init (matches torch.nn.Linear default: U(-1/sqrt(fan_in), +))
# ---------------------------------------------------------------------------
def init_params(key, n_input, ae_n_enc_1, ae_n_enc_2, ae_n_enc_3, n_z):
    keys = iter(jax.random.split(key, 8))

    def lin(fan_in, fan_out):
        bound = 1.0 / (fan_in ** 0.5)
        w = jax.random.uniform(next(keys), (fan_in, fan_out), jnp.float32,
                               -bound, bound)
        b = jax.random.uniform(next(keys), (fan_out,), jnp.float32,
                               -bound, bound)
        return w, b

    p = {}
    p["enc_1_w"], p["enc_1_b"] = lin(n_input, ae_n_enc_1)
    p["enc_2_w"], p["enc_2_b"] = lin(ae_n_enc_1, ae_n_enc_2)
    p["enc_3_w"], p["enc_3_b"] = lin(ae_n_enc_2, ae_n_enc_3)
    p["z_w"],     p["z_b"]     = lin(ae_n_enc_3, n_z)
    return p


# ---------------------------------------------------------------------------
# Pure-JAX reference for correctness check.
# ---------------------------------------------------------------------------
def ae_encoder_ref(x, p):
    def leaky(v):
        return jnp.where(v >= 0, v, 0.2 * v)

    z = leaky(x @ p["enc_1_w"] + p["enc_1_b"])
    z = leaky(z @ p["enc_2_w"] + p["enc_2_b"])
    z = leaky(z @ p["enc_3_w"] + p["enc_3_b"])
    return z @ p["z_w"] + p["z_b"]


# ---------------------------------------------------------------------------
if __name__ == "__main__":
    # Small shapes consistent with the module: x is (num_nodes, n_input).
    N          = 256
    n_input    = 64
    ae_n_enc_1 = 128
    ae_n_enc_2 = 64
    ae_n_enc_3 = 32
    n_z        = 16

    key = jax.random.PRNGKey(0)
    k_param, k_x = jax.random.split(key)
    params = init_params(k_param, n_input, ae_n_enc_1, ae_n_enc_2,
                         ae_n_enc_3, n_z)
    x = jax.random.normal(k_x, (N, n_input), jnp.float32)

    z_ae = ae_encoder_forward(x, params)
    jax.block_until_ready(z_ae)

    assert z_ae.shape == (N, n_z)

    # Verify against the pure-JAX reference.
    z_ref = ae_encoder_ref(x, params)
    err = jnp.max(jnp.abs(z_ae - z_ref))
    assert float(err) < 1e-4, f"max abs error {float(err)}"

    print("KERNEL_OK")
</pallas_src>

<mosaic_0001>
module attributes {stable_mosaic.version = 11 : i64} {
  func.func @_ae_encoder_kernel(%arg0: i32, %arg1: memref<128x64xf32, #tpu.memory_space<vmem>>, %arg2: memref<64x128xf32, #tpu.memory_space<vmem>>, %arg3: memref<1x128xf32, #tpu.memory_space<vmem>>, %arg4: memref<128x64xf32, #tpu.memory_space<vmem>>, %arg5: memref<1x64xf32, #tpu.memory_space<vmem>>, %arg6: memref<64x32xf32, #tpu.memory_space<vmem>>, %arg7: memref<1x32xf32, #tpu.memory_space<vmem>>, %arg8: memref<32x16xf32, #tpu.memory_space<vmem>>, %arg9: memref<1x16xf32, #tpu.memory_space<vmem>>, %arg10: memref<128x16xf32, #tpu.memory_space<vmem>>) attributes {dimension_semantics = [#tpu.dimension_semantics<parallel>], iteration_bounds = array<i64: 2>, scalar_prefetch = 0 : i64, scratch_operands = 0 : i64, tpu.core_type = #tpu.core_type<tc>, window_params = [{transform_indices = @transform_0, window_bounds = array<i64: 128, 64>}, {pipeline_mode = #tpu.pipeline_mode<synchronous>, transform_indices = @transform_1, window_bounds = array<i64: 64, 128>}, {pipeline_mode = #tpu.pipeline_mode<synchronous>, transform_indices = @transform_2, window_bounds = array<i64: 1, 128>}, {pipeline_mode = #tpu.pipeline_mode<synchronous>, transform_indices = @transform_3, window_bounds = array<i64: 128, 64>}, {pipeline_mode = #tpu.pipeline_mode<synchronous>, transform_indices = @transform_4, window_bounds = array<i64: 1, 64>}, {pipeline_mode = #tpu.pipeline_mode<synchronous>, transform_indices = @transform_5, window_bounds = array<i64: 64, 32>}, {pipeline_mode = #tpu.pipeline_mode<synchronous>, transform_indices = @transform_6, window_bounds = array<i64: 1, 32>}, {pipeline_mode = #tpu.pipeline_mode<synchronous>, transform_indices = @transform_7, window_bounds = array<i64: 32, 16>}, {pipeline_mode = #tpu.pipeline_mode<synchronous>, transform_indices = @transform_8, window_bounds = array<i64: 1, 16>}, {transform_indices = @transform_9, window_bounds = array<i64: 128, 16>}]} {
    %c0 = arith.constant 0 : index
    %c0_0 = arith.constant 0 : index
    %0 = vector.load %arg1[%c0, %c0_0] : memref<128x64xf32, #tpu.memory_space<vmem>>, vector<128x64xf32>
    %c0_1 = arith.constant 0 : index
    %c0_2 = arith.constant 0 : index
    %1 = vector.load %arg2[%c0_1, %c0_2] : memref<64x128xf32, #tpu.memory_space<vmem>>, vector<64x128xf32>
    %cst = arith.constant dense<0.000000e+00> : vector<128x128xf32>
    %2 = tpu.matmul %0, %1, %cst {dimension_numbers = #tpu.dot_dimension_numbers<[1], [0], [0], [1], [0, 0, 1, 1], [], []>} : vector<128x64xf32>, vector<64x128xf32>, vector<128x128xf32> -> vector<128x128xf32>
    %c0_3 = arith.constant 0 : index
    %c0_4 = arith.constant 0 : index
    %3 = vector.load %arg3[%c0_3, %c0_4] : memref<1x128xf32, #tpu.memory_space<vmem>>, vector<1x128xf32>
    %4 = vector.broadcast %3 : vector<1x128xf32> to vector<128x128xf32>
    %5 = arith.addf %2, %4 : vector<128x128xf32>
    %cst_5 = arith.constant 2.000000e-01 : f32
    %6 = vector.broadcast %cst_5 : f32 to vector<128x128xf32>
    %7 = arith.mulf %6, %5 : vector<128x128xf32>
    %8 = arith.maximumf %5, %7 : vector<128x128xf32>
    %c0_6 = arith.constant 0 : index
    %c0_7 = arith.constant 0 : index
    %9 = vector.load %arg4[%c0_6, %c0_7] : memref<128x64xf32, #tpu.memory_space<vmem>>, vector<128x64xf32>
    %cst_8 = arith.constant dense<0.000000e+00> : vector<128x64xf32>
    %10 = tpu.matmul %8, %9, %cst_8 {dimension_numbers = #tpu.dot_dimension_numbers<[1], [0], [0], [1], [0, 0, 1, 1], [], []>} : vector<128x128xf32>, vector<128x64xf32>, vector<128x64xf32> -> vector<128x64xf32>
    %c0_9 = arith.constant 0 : index
    %c0_10 = arith.constant 0 : index
    %11 = vector.load %arg5[%c0_9, %c0_10] : memref<1x64xf32, #tpu.memory_space<vmem>>, vector<1x64xf32>
    %12 = vector.broadcast %11 : vector<1x64xf32> to vector<128x64xf32>
    %13 = arith.addf %10, %12 : vector<128x64xf32>
    %cst_11 = arith.constant 2.000000e-01 : f32
    %14 = vector.broadcast %cst_11 : f32 to vector<128x64xf32>
    %15 = arith.mulf %14, %13 : vector<128x64xf32>
    %16 = arith.maximumf %13, %15 : vector<128x64xf32>
    %c0_12 = arith.constant 0 : index
    %c0_13 = arith.constant 0 : index
    %17 = vector.load %arg6[%c0_12, %c0_13] : memref<64x32xf32, #tpu.memory_space<vmem>>, vector<64x32xf32>
    %cst_14 = arith.constant dense<0.000000e+00> : vector<128x32xf32>
    %18 = tpu.matmul %16, %17, %cst_14 {dimension_numbers = #tpu.dot_dimension_numbers<[1], [0], [0], [1], [0, 0, 1, 1], [], []>} : vector<128x64xf32>, vector<64x32xf32>, vector<128x32xf32> -> vector<128x32xf32>
    %c0_15 = arith.constant 0 : index
    %c0_16 = arith.constant 0 : index
    %19 = vector.load %arg7[%c0_15, %c0_16] : memref<1x32xf32, #tpu.memory_space<vmem>>, vector<1x32xf32>
    %20 = vector.broadcast %19 : vector<1x32xf32> to vector<128x32xf32>
    %21 = arith.addf %18, %20 : vector<128x32xf32>
    %cst_17 = arith.constant 2.000000e-01 : f32
    %22 = vector.broadcast %cst_17 : f32 to vector<128x32xf32>
    %23 = arith.mulf %22, %21 : vector<128x32xf32>
    %24 = arith.maximumf %21, %23 : vector<128x32xf32>
    %c0_18 = arith.constant 0 : index
    %c0_19 = arith.constant 0 : index
    %25 = vector.load %arg8[%c0_18, %c0_19] : memref<32x16xf32, #tpu.memory_space<vmem>>, vector<32x16xf32>
    %cst_20 = arith.constant dense<0.000000e+00> : vector<128x16xf32>
    %26 = tpu.matmul %24, %25, %cst_20 {dimension_numbers = #tpu.dot_dimension_numbers<[1], [0], [0], [1], [0, 0, 1, 1], [], []>} : vector<128x32xf32>, vector<32x16xf32>, vector<128x16xf32> -> vector<128x16xf32>
    %c0_21 = arith.constant 0 : index
    %c0_22 = arith.constant 0 : index
    %27 = vector.load %arg9[%c0_21, %c0_22] : memref<1x16xf32, #tpu.memory_space<vmem>>, vector<1x16xf32>
    %28 = vector.broadcast %27 : vector<1x16xf32> to vector<128x16xf32>
    %29 = arith.addf %26, %28 : vector<128x16xf32>
    %c0_23 = arith.constant 0 : index
    %c0_24 = arith.constant 0 : index
    %30 = vector.load %arg10[%c0_23, %c0_24] : memref<128x16xf32, #tpu.memory_space<vmem>>, vector<128x16xf32>
    tpu.vector_store %arg10[%c0_23, %c0_24], %29 {strides = array<i32>} : memref<128x16xf32, #tpu.memory_space<vmem>>, vector<128x16xf32>,
    return
  }
  func.func @transform_0(%arg0: i32) -> (i32, i32) {
    %c0_i32 = arith.constant 0 : i32
    %c0_i32_0 = arith.constant 0 : i32
    return %arg0, %c0_i32 : i32, i32
  }
  func.func @transform_1(%arg0: i32) -> (i32, i32) {
    %c0_i32 = arith.constant 0 : i32
    %c0_i32_0 = arith.constant 0 : i32
    %c0_i32_1 = arith.constant 0 : i32
    return %c0_i32, %c0_i32_0 : i32, i32
  }
  func.func @transform_2(%arg0: i32) -> (i32, i32) {
    %c0_i32 = arith.constant 0 : i32
    %c0_i32_0 = arith.constant 0 : i32
    %c0_i32_1 = arith.constant 0 : i32
    return %c0_i32, %c0_i32_0 : i32, i32
  }
  func.func @transform_3(%arg0: i32) -> (i32, i32) {
    %c0_i32 = arith.constant 0 : i32
    %c0_i32_0 = arith.constant 0 : i32
    %c0_i32_1 = arith.constant 0 : i32
    return %c0_i32, %c0_i32_0 : i32, i32
  }
  func.func @transform_4(%arg0: i32) -> (i32, i32) {
    %c0_i32 = arith.constant 0 : i32
    %c0_i32_0 = arith.constant 0 : i32
    %c0_i32_1 = arith.constant 0 : i32
    return %c0_i32, %c0_i32_0 : i32, i32
  }
  func.func @transform_5(%arg0: i32) -> (i32, i32) {
    %c0_i32 = arith.constant 0 : i32
    %c0_i32_0 = arith.constant 0 : i32
    %c0_i32_1 = arith.constant 0 : i32
    return %c0_i32, %c0_i32_0 : i32, i32
  }
  func.func @transform_6(%arg0: i32) -> (i32, i32) {
    %c0_i32 = arith.constant 0 : i32
    %c0_i32_0 = arith.constant 0 : i32
    %c0_i32_1 = arith.constant 0 : i32
    return %c0_i32, %c0_i32_0 : i32, i32
  }
  func.func @transform_7(%arg0: i32) -> (i32, i32) {
    %c0_i32 = arith.constant 0 : i32
    %c0_i32_0 = arith.constant 0 : i32
    %c0_i32_1 = arith.constant 0 : i32
    return %c0_i32, %c0_i32_0 : i32, i32
  }
  func.func @transform_8(%arg0: i32) -> (i32, i32) {
    %c0_i32 = arith.constant 0 : i32
    %c0_i32_0 = arith.constant 0 : i32
    %c0_i32_1 = arith.constant 0 : i32
    return %c0_i32, %c0_i32_0 : i32, i32
  }
  func.func @transform_9(%arg0: i32) -> (i32, i32) {
    %c0_i32 = arith.constant 0 : i32
    %c0_i32_0 = arith.constant 0 : i32
    return %arg0, %c0_i32 : i32, i32
  }
}

</mosaic_0001>

<llo_original>
// kernel: tpu_custom_call.1
$region0: #{tpu_custom_call.1}
  #allocation0 [shape = 'u32[]', space=smem, size = 0x4, offset = 0x4, fixed_abs, tag = 'smem constant byte address 0x4 - core index']
  #allocation1 [shape = 'u32[144,128]{1,0:T(1,128)}', space=vmem, size = 0x12000, scoped, tag = 'internal scratch']
  %s0 = inlined_call_operand.vmem [shape: f32[256,64], index: 0, kind: input, shape index: {}]
  %s1 = inlined_call_operand.vmem [shape: f32[64,128], index: 1, kind: input, shape index: {}]
  %s2 = inlined_call_operand.vmem [shape: f32[1,128], index: 2, kind: input, shape index: {}]
  %s3 = inlined_call_operand.vmem [shape: f32[128,64], index: 3, kind: input, shape index: {}]
  %s4 = inlined_call_operand.vmem [shape: f32[1,64], index: 4, kind: input, shape index: {}]
  %s5 = inlined_call_operand.vmem [shape: f32[64,32], index: 5, kind: input, shape index: {}]
  %s6 = inlined_call_operand.vmem [shape: f32[1,32], index: 6, kind: input, shape index: {}]
  %s7 = inlined_call_operand.vmem [shape: f32[32,16], index: 7, kind: input, shape index: {}]
  %s8 = inlined_call_operand.vmem [shape: f32[1,16], index: 8, kind: input, shape index: {}]
  %s9 = inlined_call_operand.vmem [shape: f32[256,16], index: 9, kind: output, shape index: {}]
  %s10 = sld [smem:[#allocation0]]
  $region69: #{tpu_custom_call.1} parent=0
    _
  %s12 = ssub.s32 1, %s10
  %s13 = scalar_select 0, %s12, %s10
  loop: start=0, step=1, limit=4
  $region2: #{tpu_custom_call.1} parent=0 // loop_pre_header
    _
  $region3: #{tpu_custom_call.1} parent=0 // loop_header
    %s15 = sphi 0, %s19
    %p16 = scmp.ge.s32.totalorder %s15, 4
    %s25 = sphi 0, %s27
    %s28 = sphi 0, %s25
    %s29 = sphi 0, %s28
    %s45 = sphi 0, %s29
    %s49 = sphi 0, %s49
    %s51 = sphi 0, %s49
    %s52 = sphi 0, %s51
    %s66 = sphi 0, %s52
    %s70 = sphi 0, %s70
    %s72 = sphi 0, %s70
    %s73 = sphi 0, %s72
    %s87 = sphi 0, %s73
    %s91 = sphi 0, %s91
    %s93 = sphi 0, %s91
    %s94 = sphi 0, %s93
    %s108 = sphi 0, %s94
    %s112 = sphi 0, %s112
    %s114 = sphi 0, %s112
    %s115 = sphi 0, %s114
    %s129 = sphi 0, %s115
    %s133 = sphi 0, %s133
    %s135 = sphi 0, %s133
    %s136 = sphi 0, %s135
    %s150 = sphi 0, %s136
    %s154 = sphi 0, %s154
    %s156 = sphi 0, %s154
    %s157 = sphi 0, %s156
    %s171 = sphi 0, %s157
    %s175 = sphi 0, %s175
    %s177 = sphi 0, %s175
    %s178 = sphi 0, %s177
    %s192 = sphi 0, %s178
    %s196 = sphi 0, %s196
    %s198 = sphi 0, %s196
    %s199 = sphi 0, %s198
    %s213 = sphi 0, %s199
    %s219 = sphi 0, %s221
    %s222 = sphi 0, %s219
    %s223 = sphi 0, %s222
    %s239 = sphi 0, %s223
  $region4: #{tpu_custom_call.1} parent=0 // loop_header_branch
    %18 = sbr.rel (%p16) target = $region8
  $region5: #{tpu_custom_call.1} parent=0 // loop_body
    %s20 = ssub.s32 %s15, 1
    %s21 = ssub.s32 %s15, 2
    %s22 = sadd.s32 %s15, 1
    %s23 = ssub.s32 %s15, %s22
    %p24 = scmp.eq.s32.totalorder %s23, 0
    %s26 = sadd.s32 %s25, 1
    %s27 = scalar_select %p24, %s25, %s26
    %p30 = pneg %p24
    %p31 = scmp.eq.s32.totalorder %s15, 1
    %p32 = por %p30, %p31
    %p33 = scmp.ne.s32.totalorder %s25, %s28
    %p34 = scmp.eq.s32.totalorder %s15, 0
    %p35 = por %p33, %p34
    %p36 = scmp.ne.s32.totalorder %s25, %s28
    %p37 = scmp.eq.s32.totalorder %s20, 1
    %p38 = por %p36, %p37
    %p39 = scmp.ne.s32.totalorder %s28, %s29
    %p40 = scmp.eq.s32.totalorder %s20, 0
    %p41 = por %p39, %p40
    %p42 = scmp.ne.s32.totalorder %s28, %s29
    %p43 = scmp.eq.s32.totalorder %s21, 1
    %p44 = por %p42, %p43
    %p46 = scmp.ne.s32.totalorder %s29, %s45
    %p47 = scmp.eq.s32.totalorder %s21, 0
    %p48 = por %p46, %p47
    %s50 = sadd.s32 %s49, 1
    %p53 = scmp.eq.s32.totalorder %s15, 1
    %p54 = scmp.ne.s32.totalorder %s49, %s51
    %p55 = scmp.eq.s32.totalorder %s15, 0
    %p56 = por %p54, %p55
    %p57 = scmp.ne.s32.totalorder %s49, %s51
    %p58 = scmp.eq.s32.totalorder %s20, 1
    %p59 = por %p57, %p58
    %p60 = scmp.ne.s32.totalorder %s51, %s52
    %p61 = scmp.eq.s32.totalorder %s20, 0
    %p62 = por %p60, %p61
    %p63 = scmp.ne.s32.totalorder %s51, %s52
    %p64 = scmp.eq.s32.totalorder %s21, 1
    %p65 = por %p63, %p64
    %p67 = scmp.ne.s32.totalorder %s52, %s66
    %p68 = scmp.eq.s32.totalorder %s21, 0
    %p69 = por %p67, %p68
    %s71 = sadd.s32 %s70, 1
    %p74 = scmp.eq.s32.totalorder %s15, 1
    %p75 = scmp.ne.s32.totalorder %s70, %s72
    %p76 = scmp.eq.s32.totalorder %s15, 0
    %p77 = por %p75, %p76
    %p78 = scmp.ne.s32.totalorder %s70, %s72
    %p79 = scmp.eq.s32.totalorder %s20, 1
    %p80 = por %p78, %p79
    %p81 = scmp.ne.s32.totalorder %s72, %s73
    %p82 = scmp.eq.s32.totalorder %s20, 0
    %p83 = por %p81, %p82
    %p84 = scmp.ne.s32.totalorder %s72, %s73
    %p85 = scmp.eq.s32.totalorder %s21, 1
    %p86 = por %p84, %p85
    %p88 = scmp.ne.s32.totalorder %s73, %s87
    %p89 = scmp.eq.s32.totalorder %s21, 0
    %p90 = por %p88, %p89
    %s92 = sadd.s32 %s91, 1
    %p95 = scmp.eq.s32.totalorder %s15, 1
    %p96 = scmp.ne.s32.totalorder %s91, %s93
    %p97 = scmp.eq.s32.totalorder %s15, 0
    %p98 = por %p96, %p97
    %p99 = scmp.ne.s32.totalorder %s91, %s93
    %p100 = scmp.eq.s32.totalorder %s20, 1
    %p101 = por %p99, %p100
    %p102 = scmp.ne.s32.totalorder %s93, %s94
    %p103 = scmp.eq.s32.totalorder %s20, 0
    %p104 = por %p102, %p103
    %p105 = scmp.ne.s32.totalorder %s93, %s94
    %p106 = scmp.eq.s32.totalorder %s21, 1
    %p107 = por %p105, %p106
    %p109 = scmp.ne.s32.totalorder %s94, %s108
    %p110 = scmp.eq.s32.totalorder %s21, 0
    %p111 = por %p109, %p110
    %s113 = sadd.s32 %s112, 1
    %p116 = scmp.eq.s32.totalorder %s15, 1
    %p117 = scmp.ne.s32.totalorder %s112, %s114
    %p118 = scmp.eq.s32.totalorder %s15, 0
    %p119 = por %p117, %p118
    %p120 = scmp.ne.s32.totalorder %s112, %s114
    %p121 = scmp.eq.s32.totalorder %s20, 1
    %p122 = por %p120, %p121
    %p123 = scmp.ne.s32.totalorder %s114, %s115
    %p124 = scmp.eq.s32.totalorder %s20, 0
    %p125 = por %p123, %p124
    %p126 = scmp.ne.s32.totalorder %s114, %s115
    %p127 = scmp.eq.s32.totalorder %s21, 1
    %p128 = por %p126, %p127
    %p130 = scmp.ne.s32.totalorder %s115, %s129
    %p131 = scmp.eq.s32.totalorder %s21, 0
    %p132 = por %p130, %p131
    %s134 = sadd.s32 %s133, 1
    %p137 = scmp.eq.s32.totalorder %s15, 1
    %p138 = scmp.ne.s32.totalorder %s133, %s135
    %p139 = scmp.eq.s32.totalorder %s15, 0
    %p140 = por %p138, %p139
    %p141 = scmp.ne.s32.totalorder %s133, %s135
    %p142 = scmp.eq.s32.totalorder %s20, 1
    %p143 = por %p141, %p142
    %p144 = scmp.ne.s32.totalorder %s135, %s136
    %p145 = scmp.eq.s32.totalorder %s20, 0
    %p146 = por %p144, %p145
    %p147 = scmp.ne.s32.totalorder %s135, %s136
    %p148 = scmp.eq.s32.totalorder %s21, 1
    %p149 = por %p147, %p148
    %p151 = scmp.ne.s32.totalorder %s136, %s150
    %p152 = scmp.eq.s32.totalorder %s21, 0
    %p153 = por %p151, %p152
    %s155 = sadd.s32 %s154, 1
    %p158 = scmp.eq.s32.totalorder %s15, 1
    %p159 = scmp.ne.s32.totalorder %s154, %s156
    %p160 = scmp.eq.s32.totalorder %s15, 0
    %p161 = por %p159, %p160
    %p162 = scmp.ne.s32.totalorder %s154, %s156
    %p163 = scmp.eq.s32.totalorder %s20, 1
    %p164 = por %p162, %p163
    %p165 = scmp.ne.s32.totalorder %s156, %s157
    %p166 = scmp.eq.s32.totalorder %s20, 0
    %p167 = por %p165, %p166
    %p168 = scmp.ne.s32.totalorder %s156, %s157
    %p169 = scmp.eq.s32.totalorder %s21, 1
    %p170 = por %p168, %p169
    %p172 = scmp.ne.s32.totalorder %s157, %s171
    %p173 = scmp.eq.s32.totalorder %s21, 0
    %p174 = por %p172, %p173
    %s176 = sadd.s32 %s175, 1
    %p179 = scmp.eq.s32.totalorder %s15, 1
    %p180 = scmp.ne.s32.totalorder %s175, %s177
    %p181 = scmp.eq.s32.totalorder %s15, 0
    %p182 = por %p180, %p181
    %p183 = scmp.ne.s32.totalorder %s175, %s177
    %p184 = scmp.eq.s32.totalorder %s20, 1
    %p185 = por %p183, %p184
    %p186 = scmp.ne.s32.totalorder %s177, %s178
    %p187 = scmp.eq.s32.totalorder %s20, 0
    %p188 = por %p186, %p187
    %p189 = scmp.ne.s32.totalorder %s177, %s178
    %p190 = scmp.eq.s32.totalorder %s21, 1
    %p191 = por %p189, %p190
    %p193 = scmp.ne.s32.totalorder %s178, %s192
    %p194 = scmp.eq.s32.totalorder %s21, 0
    %p195 = por %p193, %p194
    %s197 = sadd.s32 %s196, 1
    %p200 = scmp.eq.s32.totalorder %s15, 1
    %p201 = scmp.ne.s32.totalorder %s196, %s198
    %p202 = scmp.eq.s32.totalorder %s15, 0
    %p203 = por %p201, %p202
    %p204 = scmp.ne.s32.totalorder %s196, %s198
    %p205 = scmp.eq.s32.totalorder %s20, 1
    %p206 = por %p204, %p205
    %p207 = scmp.ne.s32.totalorder %s198, %s199
    %p208 = scmp.eq.s32.totalorder %s20, 0
    %p209 = por %p207, %p208
    %p210 = scmp.ne.s32.totalorder %s198, %s199
    %p211 = scmp.eq.s32.totalorder %s21, 1
    %p212 = por %p210, %p211
    %p214 = scmp.ne.s32.totalorder %s199, %s213
    %p215 = scmp.eq.s32.totalorder %s21, 0
    %p216 = por %p214, %p215
    %s217 = ssub.s32 %s15, %s22
    %p218 = scmp.eq.s32.totalorder %s217, 0
    %s220 = sadd.s32 %s219, 1
    %s221 = scalar_select %p218, %s219, %s220
    %p224 = pneg %p218
    %p225 = scmp.eq.s32.totalorder %s15, 1
    %p226 = por %p224, %p225
    %p227 = scmp.ne.s32.totalorder %s219, %s222
    %p228 = scmp.eq.s32.totalorder %s15, 0
    %p229 = por %p227, %p228
    %p230 = scmp.ne.s32.totalorder %s219, %s222
    %p231 = scmp.eq.s32.totalorder %s20, 1
    %p232 = por %p230, %p231
    %p233 = scmp.ne.s32.totalorder %s222, %s223
    %p234 = scmp.eq.s32.totalorder %s20, 0
    %p235 = por %p233, %p234
    %p236 = scmp.ne.s32.totalorder %s222, %s223
    %p237 = scmp.eq.s32.totalorder %s21, 1
    %p238 = por %p236, %p237
    %p240 = scmp.ne.s32.totalorder %s223, %s239
    %p241 = scmp.eq.s32.totalorder %s21, 0
    %p242 = por %p240, %p241
    %p243 = scmp.le.s32.totalorder 1, %s15
    %p244 = scmp.lt.s32.totalorder %s15, 3
    %p245 = pnand %p243, %p244
    %p246 = pneg %p245
    // Predicated region
    $region9: #{tpu_custom_call.1} parent=5 // pred_check
      _
    $region10: #{tpu_custom_call.1} parent=5 // pred_check_branch
      %248 = sbr.rel (%p245) target = $region12
    $region11: #{tpu_custom_call.1} parent=5 // pred_region
      %s249 = ssub.s32 %s15, 1
      // Predicated region
      $region13: #{tpu_custom_call.1} parent=11 // pred_check
        %p250 = pneg %p62
      $region14: #{tpu_custom_call.1} parent=11 // pred_check_branch
        %252 = sbr.rel (%p250) target = $region16
      $region15: #{tpu_custom_call.1} parent=11 // pred_region
        _
      $region16: #{tpu_custom_call.1} parent=11 // pred_fallthru
        _
      // Predicated region
      $region17: #{tpu_custom_call.1} parent=11 // pred_check
        %p253 = pneg %p83
      $region18: #{tpu_custom_call.1} parent=11 // pred_check_branch
        %255 = sbr.rel (%p253) target = $region20
      $region19: #{tpu_custom_call.1} parent=11 // pred_region
        _
      $region20: #{tpu_custom_call.1} parent=11 // pred_fallthru
        _
      // Predicated region
      $region21: #{tpu_custom_call.1} parent=11 // pred_check
        %p256 = pneg %p104
      $region22: #{tpu_custom_call.1} parent=11 // pred_check_branch
        %258 = sbr.rel (%p256) target = $region24
      $region23: #{tpu_custom_call.1} parent=11 // pred_region
        _
      $region24: #{tpu_custom_call.1} parent=11 // pred_fallthru
        _
      // Predicated region
      $region25: #{tpu_custom_call.1} parent=11 // pred_check
        %p259 = pneg %p125
      $region26: #{tpu_custom_call.1} parent=11 // pred_check_branch
        %261 = sbr.rel (%p259) target = $region28
      $region27: #{tpu_custom_call.1} parent=11 // pred_region
        _
      $region28: #{tpu_custom_call.1} parent=11 // pred_fallthru
        _
      // Predicated region
      $region29: #{tpu_custom_call.1} parent=11 // pred_check
        %p262 = pneg %p146
      $region30: #{tpu_custom_call.1} parent=11 // pred_check_branch
        %264 = sbr.rel (%p262) target = $region32
      $region31: #{tpu_custom_call.1} parent=11 // pred_region
        _
      $region32: #{tpu_custom_call.1} parent=11 // pred_fallthru
        _
      // Predicated region
      $region33: #{tpu_custom_call.1} parent=11 // pred_check
        %p265 = pneg %p167
      $region34: #{tpu_custom_call.1} parent=11 // pred_check_branch
        %267 = sbr.rel (%p265) target = $region36
      $region35: #{tpu_custom_call.1} parent=11 // pred_region
        _
      $region36: #{tpu_custom_call.1} parent=11 // pred_fallthru
        _
      // Predicated region
      $region37: #{tpu_custom_call.1} parent=11 // pred_check
        %p268 = pneg %p188
      $region38: #{tpu_custom_call.1} parent=11 // pred_check_branch
        %270 = sbr.rel (%p268) target = $region40
      $region39: #{tpu_custom_call.1} parent=11 // pred_region
        _
      $region40: #{tpu_custom_call.1} parent=11 // pred_fallthru
        _
      // Predicated region
      $region41: #{tpu_custom_call.1} parent=11 // pred_check
        %p271 = pneg %p209
      $region42: #{tpu_custom_call.1} parent=11 // pred_check_branch
        %273 = sbr.rel (%p271) target = $region44
      $region43: #{tpu_custom_call.1} parent=11 // pred_region
        _
      $region44: #{tpu_custom_call.1} parent=11 // pred_fallthru
        _
    $region12: #{tpu_custom_call.1} parent=5 // pred_fallthru
      _
    %p274 = scmp.lt.s32.totalorder %s15, 2
    // Predicated region
    $region45: #{tpu_custom_call.1} parent=5 // pred_check
      %p275 = pneg %p274
    $region46: #{tpu_custom_call.1} parent=5 // pred_check_branch
      %277 = sbr.rel (%p275) target = $region48
    $region47: #{tpu_custom_call.1} parent=5 // pred_region
      // Predicated region
      $region49: #{tpu_custom_call.1} parent=47 // pred_check
        %p278 = pneg %p35
      $region50: #{tpu_custom_call.1} parent=47 // pred_check_branch
        %280 = sbr.rel (%p278) target = $region52
      $region51: #{tpu_custom_call.1} parent=47 // pred_region
        %s281 = smul.u32 16, %s15
        %p282 = scmp.lt.s32.totalorder %s281, 31
        %s283 = scalar_select %p282, %s281, 31
        %s284 = smul.addr %s283, 8
        %s285 = scalar_lea.vmem %s0, %s284
        %s286 = smul.u32 16, %s15
      $region52: #{tpu_custom_call.1} parent=47 // pred_fallthru
        _
    $region48: #{tpu_custom_call.1} parent=5 // pred_fallthru
      _
    %p287 = scmp.le.s32.totalorder 1, %s15
    %p288 = scmp.lt.s32.totalorder %s15, 3
    %p289 = pnand %p287, %p288
    %p290 = pneg %p289
    // Predicated region
    $region53: #{tpu_custom_call.1} parent=5 // pred_check
      _
    $region54: #{tpu_custom_call.1} parent=5 // pred_check_branch
      %292 = sbr.rel (%p289) target = $region56
    $region55: #{tpu_custom_call.1} parent=5 // pred_region
      %s293 = ssub.s32 %s15, 1
      %s294 = smul.u32 16, %s20
      %p295 = scmp.lt.s32.totalorder %s294, 31
      %s296 = scalar_select %p295, %s294, 31
      %s297 = smul.addr %s296, 8
      %s298 = scalar_lea.vmem %s0, %s297
      %p299 = pneg %p41
      %p300 = pneg %p38
      %p301 = pneg %p62
      %p302 = pneg %p59
      %p303 = pneg %p83
      %p304 = pneg %p80
      %p305 = pneg %p104
      %p306 = pneg %p101
      %p307 = pneg %p125
      %p308 = pneg %p122
      %p309 = pneg %p146
      %p310 = pneg %p143
      %p311 = pneg %p167
      %p312 = pneg %p164
      %p313 = pneg %p188
      %p314 = pneg %p185
      %p315 = pneg %p209
      %p316 = pneg %p206
      %p317 = pneg %p235
      %p318 = pneg %p232
      %s319 = smul.u32 16, %s20
      %p320 = scmp.lt.s32.totalorder %s319, 31
      %s321 = scalar_select %p320, %s319, 31
      %s322 = smul.addr %s321, 8
      %s323 = scalar_lea.vmem %s9, %s322
      %s324 = smul.u32 16, %s20
      %p325 = scmp.lt.s32.totalorder %s324, 31
      %s326 = scalar_select %p325, %s324, 31
      %s327 = smul.addr %s326, 8
      %s328 = scalar_lea.vmem %s0, %s327
      %s329 = smul.u32 16, %s20
      %s330 = smul.u32 16, %s20
      %p331 = scmp.lt.s32.totalorder %s330, 31
      %s332 = scalar_select %p331, %s330, 31
      %s333 = smul.addr %s332, 8
      %s334 = scalar_lea.vmem %s9, %s333
      %s335 = smul.u32 16, %s20
      %v336 = vld [vmem:[%s328] sm:$0xff]
      %v337 = vld [vmem:[%s328 + $0x8] sm:$0xff]
      %v338 = vld [vmem:[%s328 + $0x10] sm:$0xff]
      %v339 = vld [vmem:[%s328 + $0x18] sm:$0xff]
      %v340 = vld [vmem:[%s328 + $0x20] sm:$0xff]
      %v341 = vld [vmem:[%s328 + $0x28] sm:$0xff]
      %v342 = vld [vmem:[%s328 + $0x30] sm:$0xff]
      %v343 = vld [vmem:[%s328 + $0x38] sm:$0xff]
      %v344 = vld [vmem:[%s328 + $0x40] sm:$0xff]
      %v345 = vld [vmem:[%s328 + $0x48] sm:$0xff]
      %v346 = vld [vmem:[%s328 + $0x50] sm:$0xff]
      %v347 = vld [vmem:[%s328 + $0x58] sm:$0xff]
      %v348 = vld [vmem:[%s328 + $0x60] sm:$0xff]
      %v349 = vld [vmem:[%s328 + $0x68] sm:$0xff]
      %v350 = vld [vmem:[%s328 + $0x70] sm:$0xff]
      %v351 = vld [vmem:[%s328 + $0x78] sm:$0xff]
      %v352 = vld [vmem:[%s1] sm:$0xff]
      %v353 = vld [vmem:[%s1 + $0x8] sm:$0xff]
      %v354 = vld [vmem:[%s1 + $0x10] sm:$0xff]
      %v355 = vld [vmem:[%s1 + $0x18] sm:$0xff]
      %v356 = vld [vmem:[%s1 + $0x20] sm:$0xff]
      %v357 = vld [vmem:[%s1 + $0x28] sm:$0xff]
      %v358 = vld [vmem:[%s1 + $0x30] sm:$0xff]
      %v359 = vld [vmem:[%s1 + $0x38] sm:$0xff]
      %v360 = vld [vmem:[%s2] sm:$0x1]
      %v362 = vlaneseq
      %v363 = vshrl.u32 %v362, 7
      %v364 = vsub.s32 0, %v363
      %v365 = vrot.slane %v360, %v364
      %vm367 = vcmask 523264
      %v369 = vsel %vm367, %v336, 0
      %v372 = vsel %vm367, %v337, 0
      %v375 = vsel %vm367, %v338, 0
      %v378 = vsel %vm367, %v339, 0
      %v381 = vsel %vm367, %v340, 0
      %v384 = vsel %vm367, %v341, 0
      %v387 = vsel %vm367, %v342, 0
      %v390 = vsel %vm367, %v343, 0
      %v393 = vsel %vm367, %v344, 0
      %v396 = vsel %vm367, %v345, 0
      %v399 = vsel %vm367, %v346, 0
      %v402 = vsel %vm367, %v347, 0
      %v405 = vsel %vm367, %v348, 0
      %v408 = vsel %vm367, %v349, 0
      %v411 = vsel %vm367, %v350, 0
      %v414 = vsel %vm367, %v351, 0
      %416 = vmatprep.subr.mxu0 0.0
      %417 = vmatpush1.msra.mxu0 0.0
      %418 = vmatprep.subr.mxu0 0.0
      %419 = vmatpush1.msra.mxu0 0.0
      %420 = vmatprep.subr.mxu0 0.0
      %421 = vmatpush1.msra.mxu0 0.0
      %422 = vmatprep.subr.mxu0 0.0
      %423 = vmatpush1.msra.mxu0 0.0
      %424 = vmatprep.subr.mxu0 0.0
      %425 = vmatpush1.msra.mxu0 0.0
      %426 = vmatprep.subr.mxu0 0.0
      %427 = vmatpush1.msra.mxu0 0.0
      %428 = vmatprep.subr.mxu0 0.0
      %429 = vmatpush1.msra.mxu0 0.0
      %430 = vmatprep.subr.mxu0 0.0
      %431 = vmatpush1.msra.mxu0 0.0
      %432 = vmatprep.subr.mxu0 0.0
      %433 = vmatpush1.msra.mxu0 %v359
      %434 = vmatprep.subr.mxu0 0.0
      %435 = vmatpush1.msra.mxu0 %v358
      %436 = vmatprep.subr.mxu0 0.0
      %437 = vmatpush1.msra.mxu0 %v357
      %438 = vmatprep.subr.mxu0 0.0
      %439 = vmatpush1.msra.mxu0 %v356
      %440 = vmatprep.subr.mxu0 0.0
      %441 = vmatpush1.msra.mxu0 %v355
      %442 = vmatprep.subr.mxu0 0.0
      %443 = vmatpush1.msra.mxu0 %v354
      %444 = vmatprep.subr.mxu0 0.0
      %445 = vmatpush1.msra.mxu0 %v353
      %446 = vmatprep.subr.mxu0 0.0
      %447 = vmatpush1.msra.mxu0 %v352
      %448 = vmatprep.subr.mxu0 0.0
      %449 = vmatpush2.msra.mxu0 0.0
      %450 = vmatprep.subr.mxu0 0.0
      %451 = vmatpush2.msra.mxu0 0.0
      %452 = vmatprep.subr.mxu0 0.0
      %453 = vmatpush2.msra.mxu0 0.0
      %454 = vmatprep.subr.mxu0 0.0
      %455 = vmatpush2.msra.mxu0 0.0
      %456 = vmatprep.subr.mxu0 0.0
      %457 = vmatpush2.msra.mxu0 0.0
      %458 = vmatprep.subr.mxu0 0.0
      %459 = vmatpush2.msra.mxu0 0.0
      %460 = vmatprep.subr.mxu0 0.0
      %461 = vmatpush2.msra.mxu0 0.0
      %462 = vmatprep.subr.mxu0 0.0
      %463 = vmatpush2.msra.mxu0 0.0
      %464 = vmatprep.subr.mxu0 0.0
      %465 = vmatpush2.msra.mxu0 0.0
      %466 = vmatprep.subr.mxu0 0.0
      %467 = vmatpush2.msra.mxu0 0.0
      %468 = vmatprep.subr.mxu0 0.0
      %469 = vmatpush2.msra.mxu0 0.0
      %470 = vmatprep.subr.mxu0 0.0
      %471 = vmatpush2.msra.mxu0 0.0
      %472 = vmatprep.subr.mxu0 0.0
      %473 = vmatpush2.msra.mxu0 0.0
      %474 = vmatprep.subr.mxu0 0.0
      %475 = vmatpush2.msra.mxu0 0.0
      %476 = vmatprep.subr.mxu0 0.0
      %477 = vmatpush2.msra.mxu0 0.0
      %478 = vmatprep.subr.mxu0 0.0
      %479 = vmatpush2.msra.mxu0 0.0
      %480 = vmatprep.mubr.f32.mxu0 0.0
      %481 = vmatmul.mubr.f32.gmra.mxu0 %v369
      %v482 = vpop.f32.mrf.mxu0
      %v483 = vadd.f32 %v365, %v482
      %v484 = vpop.f32.mrf.mxu0
      %485 = vmatprep.mubr.f32.mxu0 0.0
      %486 = vmatmul.mubr.f32.gmra.mxu0 %v372
      %v487 = vpop.f32.mrf.mxu0
      %v488 = vadd.f32 %v365, %v487
      %v489 = vpop.f32.mrf.mxu0
      %490 = vmatprep.mubr.f32.mxu0 0.0
      %491 = vmatmul.mubr.f32.gmra.mxu0 %v375
      %v492 = vpop.f32.mrf.mxu0
      %v493 = vadd.f32 %v365, %v492
      %v494 = vpop.f32.mrf.mxu0
      %495 = vmatprep.mubr.f32.mxu0 0.0
      %496 = vmatmul.mubr.f32.gmra.mxu0 %v378
      %v497 = vpop.f32.mrf.mxu0
      %v498 = vadd.f32 %v365, %v497
      %v499 = vpop.f32.mrf.mxu0
      %500 = vmatprep.mubr.f32.mxu0 0.0
      %501 = vmatmul.mubr.f32.gmra.mxu0 %v381
      %v502 = vpop.f32.mrf.mxu0
      %v503 = vadd.f32 %v365, %v502
      %v504 = vpop.f32.mrf.mxu0
      %505 = vmatprep.mubr.f32.mxu0 0.0
      %506 = vmatmul.mubr.f32.gmra.mxu0 %v384
      %v507 = vpop.f32.mrf.mxu0
      %v508 = vadd.f32 %v365, %v507
      %v509 = vpop.f32.mrf.mxu0
      %510 = vmatprep.mubr.f32.mxu0 0.0
      %511 = vmatmul.mubr.f32.gmra.mxu0 %v387
      %v512 = vpop.f32.mrf.mxu0
      %v513 = vadd.f32 %v365, %v512
      %v514 = vpop.f32.mrf.mxu0
      %515 = vmatprep.mubr.f32.mxu0 0.0
      %516 = vmatmul.mubr.f32.gmra.mxu0 %v390
      %v517 = vpop.f32.mrf.mxu0
      %v518 = vadd.f32 %v365, %v517
      %v519 = vpop.f32.mrf.mxu0
      %520 = vmatprep.mubr.f32.mxu0 0.0
      %521 = vmatmul.mubr.f32.gmra.mxu0 %v393
      %v522 = vpop.f32.mrf.mxu0
      %v523 = vadd.f32 %v365, %v522
      %v524 = vpop.f32.mrf.mxu0
      %525 = vmatprep.mubr.f32.mxu0 0.0
      %526 = vmatmul.mubr.f32.gmra.mxu0 %v396
      %v527 = vpop.f32.mrf.mxu0
      %v528 = vadd.f32 %v365, %v527
      %v529 = vpop.f32.mrf.mxu0
      %530 = vmatprep.mubr.f32.mxu0 0.0
      %531 = vmatmul.mubr.f32.gmra.mxu0 %v399
      %v532 = vpop.f32.mrf.mxu0
      %v533 = vadd.f32 %v365, %v532
      %v534 = vpop.f32.mrf.mxu0
      %535 = vmatprep.mubr.f32.mxu0 0.0
      %536 = vmatmul.mubr.f32.gmra.mxu0 %v402
      %v537 = vpop.f32.mrf.mxu0
      %v538 = vadd.f32 %v365, %v537
      %v539 = vpop.f32.mrf.mxu0
      %540 = vmatprep.mubr.f32.mxu0 0.0
      %541 = vmatmul.mubr.f32.gmra.mxu0 %v405
      %v542 = vpop.f32.mrf.mxu0
      %v543 = vadd.f32 %v365, %v542
      %v544 = vpop.f32.mrf.mxu0
      %545 = vmatprep.mubr.f32.mxu0 0.0
      %546 = vmatmul.mubr.f32.gmra.mxu0 %v408
      %v547 = vpop.f32.mrf.mxu0
      %v548 = vadd.f32 %v365, %v547
      %v549 = vpop.f32.mrf.mxu0
      %550 = vmatprep.mubr.f32.mxu0 0.0
      %551 = vmatmul.mubr.f32.gmra.mxu0 %v411
      %v552 = vpop.f32.mrf.mxu0
      %v553 = vadd.f32 %v365, %v552
      %v554 = vpop.f32.mrf.mxu0
      %555 = vmatprep.mubr.f32.mxu0 0.0
      %556 = vmatmul.mubr.f32.gmra.mxu0 %v414
      %v557 = vpop.f32.mrf.mxu0
      %v558 = vadd.f32 %v365, %v557
      %v559 = vpop.f32.mrf.mxu0
      %560 = vdwg.mxu0
      %v561 = vmul.f32 %v483, 0.2
      %v562 = vmul.f32 %v488, 0.2
      %v563 = vmul.f32 %v493, 0.2
      %v564 = vmul.f32 %v498, 0.2
      %v565 = vmul.f32 %v503, 0.2
      %v566 = vmul.f32 %v508, 0.2
      %v567 = vmul.f32 %v513, 0.2
      %v568 = vmul.f32 %v518, 0.2
      %v569 = vmul.f32 %v523, 0.2
      %v570 = vmul.f32 %v528, 0.2
      %v571 = vmul.f32 %v533, 0.2
      %v572 = vmul.f32 %v538, 0.2
      %v573 = vmul.f32 %v543, 0.2
      %v574 = vmul.f32 %v548, 0.2
      %v575 = vmul.f32 %v553, 0.2
      %v576 = vmul.f32 %v558, 0.2
      %v577 = vmax.f32 %v483, %v561
      %v578 = vmax.f32 %v488, %v562
      %v579 = vmax.f32 %v493, %v563
      %v580 = vmax.f32 %v498, %v564
      %v581 = vmax.f32 %v503, %v565
      %v582 = vmax.f32 %v508, %v566
      %v583 = vmax.f32 %v513, %v567
      %v584 = vmax.f32 %v518, %v568
      %v585 = vmax.f32 %v523, %v569
      %v586 = vmax.f32 %v528, %v570
      %v587 = vmax.f32 %v533, %v571
      %v588 = vmax.f32 %v538, %v572
      %v589 = vmax.f32 %v543, %v573
      %v590 = vmax.f32 %v548, %v574
      %v591 = vmax.f32 %v553, %v575
      %v592 = vmax.f32 %v558, %v576
      %v593 = vld [vmem:[%s3] sm:$0xff]
      %v594 = vld [vmem:[%s3 + $0x8] sm:$0xff]
      %v595 = vld [vmem:[%s3 + $0x10] sm:$0xff]
      %v596 = vld [vmem:[%s3 + $0x18] sm:$0xff]
      %v597 = vld [vmem:[%s3 + $0x20] sm:$0xff]
      %v598 = vld [vmem:[%s3 + $0x28] sm:$0xff]
      %v599 = vld [vmem:[%s3 + $0x30] sm:$0xff]
      %v600 = vld [vmem:[%s3 + $0x38] sm:$0xff]
      %v601 = vld [vmem:[%s3 + $0x40] sm:$0xff]
      %v602 = vld [vmem:[%s3 + $0x48] sm:$0xff]
      %v603 = vld [vmem:[%s3 + $0x50] sm:$0xff]
      %v604 = vld [vmem:[%s3 + $0x58] sm:$0xff]
      %v605 = vld [vmem:[%s3 + $0x60] sm:$0xff]
      %v606 = vld [vmem:[%s3 + $0x68] sm:$0xff]
      %v607 = vld [vmem:[%s3 + $0x70] sm:$0xff]
      %v608 = vld [vmem:[%s3 + $0x78] sm:$0xff]
      %v609 = vld [vmem:[%s4] sm:$0x1]
      %v611 = vlaneseq
      %v612 = vshrl.u32 %v611, 7
      %v613 = vsub.s32 0, %v612
      %v614 = vrot.slane %v609, %v613
      %616 = vmatprep.subr.mxu0 0.0
      %617 = vmatpush1.msra.mxu0 %v608
      %618 = vmatprep.subr.mxu0 0.0
      %619 = vmatpush1.msra.mxu0 %v607
      %620 = vmatprep.subr.mxu0 0.0
      %621 = vmatpush1.msra.mxu0 %v606
      %622 = vmatprep.subr.mxu0 0.0
      %623 = vmatpush1.msra.mxu0 %v605
      %624 = vmatprep.subr.mxu0 0.0
      %625 = vmatpush1.msra.mxu0 %v604
      %626 = vmatprep.subr.mxu0 0.0
      %627 = vmatpush1.msra.mxu0 %v603
      %628 = vmatprep.subr.mxu0 0.0
      %629 = vmatpush1.msra.mxu0 %v602
      %630 = vmatprep.subr.mxu0 0.0
      %631 = vmatpush1.msra.mxu0 %v601
      %632 = vmatprep.subr.mxu0 0.0
      %633 = vmatpush1.msra.mxu0 %v600
      %634 = vmatprep.subr.mxu0 0.0
      %635 = vmatpush1.msra.mxu0 %v599
      %636 = vmatprep.subr.mxu0 0.0
      %637 = vmatpush1.msra.mxu0 %v598
      %638 = vmatprep.subr.mxu0 0.0
      %639 = vmatpush1.msra.mxu0 %v597
      %640 = vmatprep.subr.mxu0 0.0
      %641 = vmatpush1.msra.mxu0 %v596
      %642 = vmatprep.subr.mxu0 0.0
      %643 = vmatpush1.msra.mxu0 %v595
      %644 = vmatprep.subr.mxu0 0.0
      %645 = vmatpush1.msra.mxu0 %v594
      %646 = vmatprep.subr.mxu0 0.0
      %647 = vmatpush1.msra.mxu0 %v593
      %648 = vmatprep.subr.mxu0 0.0
      %649 = vmatpush2.msra.mxu0 0.0
      %650 = vmatprep.subr.mxu0 0.0
      %651 = vmatpush2.msra.mxu0 0.0
      %652 = vmatprep.subr.mxu0 0.0
      %653 = vmatpush2.msra.mxu0 0.0
      %654 = vmatprep.subr.mxu0 0.0
      %655 = vmatpush2.msra.mxu0 0.0
      %656 = vmatprep.subr.mxu0 0.0
      %657 = vmatpush2.msra.mxu0 0.0
      %658 = vmatprep.subr.mxu0 0.0
      %659 = vmatpush2.msra.mxu0 0.0
      %660 = vmatprep.subr.mxu0 0.0
      %661 = vmatpush2.msra.mxu0 0.0
      %662 = vmatprep.subr.mxu0 0.0
      %663 = vmatpush2.msra.mxu0 0.0
      %664 = vmatprep.subr.mxu0 0.0
      %665 = vmatpush2.msra.mxu0 0.0
      %666 = vmatprep.subr.mxu0 0.0
      %667 = vmatpush2.msra.mxu0 0.0
      %668 = vmatprep.subr.mxu0 0.0
      %669 = vmatpush2.msra.mxu0 0.0
      %670 = vmatprep.subr.mxu0 0.0
      %671 = vmatpush2.msra.mxu0 0.0
      %672 = vmatprep.subr.mxu0 0.0
      %673 = vmatpush2.msra.mxu0 0.0
      %674 = vmatprep.subr.mxu0 0.0
      %675 = vmatpush2.msra.mxu0 0.0
      %676 = vmatprep.subr.mxu0 0.0
      %677 = vmatpush2.msra.mxu0 0.0
      %678 = vmatprep.subr.mxu0 0.0
      %679 = vmatpush2.msra.mxu0 0.0
      %680 = vmatprep.mubr.f32.mxu0 0.0
      %681 = vmatmul.mubr.f32.gmra.mxu0 %v577
      %v682 = vpop.f32.mrf.mxu0
      %v683 = vadd.f32 %v614, %v682
      %v684 = vpop.f32.mrf.mxu0
      %685 = vmatprep.mubr.f32.mxu0 0.0
      %686 = vmatmul.mubr.f32.gmra.mxu0 %v578
      %v687 = vpop.f32.mrf.mxu0
      %v688 = vadd.f32 %v614, %v687
      %v689 = vpop.f32.mrf.mxu0
      %690 = vmatprep.mubr.f32.mxu0 0.0
      %691 = vmatmul.mubr.f32.gmra.mxu0 %v579
      %v692 = vpop.f32.mrf.mxu0
      %v693 = vadd.f32 %v614, %v692
      %v694 = vpop.f32.mrf.mxu0
      %695 = vmatprep.mubr.f32.mxu0 0.0
      %696 = vmatmul.mubr.f32.gmra.mxu0 %v580
      %v697 = vpop.f32.mrf.mxu0
      %v698 = vadd.f32 %v614, %v697
      %v699 = vpop.f32.mrf.mxu0
      %700 = vmatprep.mubr.f32.mxu0 0.0
      %701 = vmatmul.mubr.f32.gmra.mxu0 %v581
      %v702 = vpop.f32.mrf.mxu0
      %v703 = vadd.f32 %v614, %v702
      %v704 = vpop.f32.mrf.mxu0
      %705 = vmatprep.mubr.f32.mxu0 0.0
      %706 = vmatmul.mubr.f32.gmra.mxu0 %v582
      %v707 = vpop.f32.mrf.mxu0
      %v708 = vadd.f32 %v614, %v707
      %v709 = vpop.f32.mrf.mxu0
      %710 = vmatprep.mubr.f32.mxu0 0.0
      %711 = vmatmul.mubr.f32.gmra.mxu0 %v583
      %v712 = vpop.f32.mrf.mxu0
      %v713 = vadd.f32 %v614, %v712
      %v714 = vpop.f32.mrf.mxu0
      %715 = vmatprep.mubr.f32.mxu0 0.0
      %716 = vmatmul.mubr.f32.gmra.mxu0 %v584
      %v717 = vpop.f32.mrf.mxu0
      %v718 = vadd.f32 %v614, %v717
      %v719 = vpop.f32.mrf.mxu0
      %720 = vmatprep.mubr.f32.mxu0 0.0
      %721 = vmatmul.mubr.f32.gmra.mxu0 %v585
      %v722 = vpop.f32.mrf.mxu0
      %v723 = vadd.f32 %v614, %v722
      %v724 = vpop.f32.mrf.mxu0
      %725 = vmatprep.mubr.f32.mxu0 0.0
      %726 = vmatmul.mubr.f32.gmra.mxu0 %v586
      %v727 = vpop.f32.mrf.mxu0
      %v728 = vadd.f32 %v614, %v727
      %v729 = vpop.f32.mrf.mxu0
      %730 = vmatprep.mubr.f32.mxu0 0.0
      %731 = vmatmul.mubr.f32.gmra.mxu0 %v587
      %v732 = vpop.f32.mrf.mxu0
      %v733 = vadd.f32 %v614, %v732
      %v734 = vpop.f32.mrf.mxu0
      %735 = vmatprep.mubr.f32.mxu0 0.0
      %736 = vmatmul.mubr.f32.gmra.mxu0 %v588
      %v737 = vpop.f32.mrf.mxu0
      %v738 = vadd.f32 %v614, %v737
      %v739 = vpop.f32.mrf.mxu0
      %740 = vmatprep.mubr.f32.mxu0 0.0
      %741 = vmatmul.mubr.f32.gmra.mxu0 %v589
      %v742 = vpop.f32.mrf.mxu0
      %v743 = vadd.f32 %v614, %v742
      %v744 = vpop.f32.mrf.mxu0
      %745 = vmatprep.mubr.f32.mxu0 0.0
      %746 = vmatmul.mubr.f32.gmra.mxu0 %v590
      %v747 = vpop.f32.mrf.mxu0
      %v748 = vadd.f32 %v614, %v747
      %v749 = vpop.f32.mrf.mxu0
      %750 = vmatprep.mubr.f32.mxu0 0.0
      %751 = vmatmul.mubr.f32.gmra.mxu0 %v591
      %v752 = vpop.f32.mrf.mxu0
      %v753 = vadd.f32 %v614, %v752
      %v754 = vpop.f32.mrf.mxu0
      %755 = vmatprep.mubr.f32.mxu0 0.0
      %756 = vmatmul.mubr.f32.gmra.mxu0 %v592
      %v757 = vpop.f32.mrf.mxu0
      %v758 = vadd.f32 %v614, %v757
      %v759 = vpop.f32.mrf.mxu0
      %760 = vdwg.mxu0
      %v761 = vmul.f32 %v683, 0.2
      %v762 = vmul.f32 %v688, 0.2
      %v763 = vmul.f32 %v693, 0.2
      %v764 = vmul.f32 %v698, 0.2
      %v765 = vmul.f32 %v703, 0.2
      %v766 = vmul.f32 %v708, 0.2
      %v767 = vmul.f32 %v713, 0.2
      %v768 = vmul.f32 %v718, 0.2
      %v769 = vmul.f32 %v723, 0.2
      %v770 = vmul.f32 %v728, 0.2
      %v771 = vmul.f32 %v733, 0.2
      %v772 = vmul.f32 %v738, 0.2
      %v773 = vmul.f32 %v743, 0.2
      %v774 = vmul.f32 %v748, 0.2
      %v775 = vmul.f32 %v753, 0.2
      %v776 = vmul.f32 %v758, 0.2
      %v777 = vmax.f32 %v683, %v761
      %v778 = vmax.f32 %v688, %v762
      %v779 = vmax.f32 %v693, %v763
      %v780 = vmax.f32 %v698, %v764
      %v781 = vmax.f32 %v703, %v765
      %v782 = vmax.f32 %v708, %v766
      %v783 = vmax.f32 %v713, %v767
      %v784 = vmax.f32 %v718, %v768
      %v785 = vmax.f32 %v723, %v769
      %v786 = vmax.f32 %v728, %v770
      %v787 = vmax.f32 %v733, %v771
      %v788 = vmax.f32 %v738, %v772
      %v789 = vmax.f32 %v743, %v773
      %v790 = vmax.f32 %v748, %v774
      %v791 = vmax.f32 %v753, %v775
      %v792 = vmax.f32 %v758, %v776
      %v793 = vld [vmem:[%s5] sm:$0xff]
      %v794 = vld [vmem:[%s5 + $0x8] sm:$0xff]
      %v795 = vld [vmem:[%s5 + $0x10] sm:$0xff]
      %v796 = vld [vmem:[%s5 + $0x18] sm:$0xff]
      %v797 = vld [vmem:[%s5 + $0x20] sm:$0xff]
      %v798 = vld [vmem:[%s5 + $0x28] sm:$0xff]
      %v799 = vld [vmem:[%s5 + $0x30] sm:$0xff]
      %v800 = vld [vmem:[%s5 + $0x38] sm:$0xff]
      %v801 = vld [vmem:[%s6] sm:$0x1]
      %v803 = vlaneseq
      %v804 = vshrl.u32 %v803, 7
      %v805 = vsub.s32 0, %v804
      %v806 = vrot.slane %v801, %v805
      %v809 = vsel %vm367, %v777, 0
      %v812 = vsel %vm367, %v778, 0
      %v815 = vsel %vm367, %v779, 0
      %v818 = vsel %vm367, %v780, 0
      %v821 = vsel %vm367, %v781, 0
      %v824 = vsel %vm367, %v782, 0
      %v827 = vsel %vm367, %v783, 0
      %v830 = vsel %vm367, %v784, 0
      %v833 = vsel %vm367, %v785, 0
      %v836 = vsel %vm367, %v786, 0
      %v839 = vsel %vm367, %v787, 0
      %v842 = vsel %vm367, %v788, 0
      %v845 = vsel %vm367, %v789, 0
      %v848 = vsel %vm367, %v790, 0
      %v851 = vsel %vm367, %v791, 0
      %v854 = vsel %vm367, %v792, 0
      %856 = vmatprep.subr.mxu0 0.0
      %857 = vmatpush1.msra.mxu0 0.0
      %858 = vmatprep.subr.mxu0 0.0
      %859 = vmatpush1.msra.mxu0 0.0
      %860 = vmatprep.subr.mxu0 0.0
      %861 = vmatpush1.msra.mxu0 0.0
      %862 = vmatprep.subr.mxu0 0.0
      %863 = vmatpush1.msra.mxu0 0.0
      %864 = vmatprep.subr.mxu0 0.0
      %865 = vmatpush1.msra.mxu0 0.0
      %866 = vmatprep.subr.mxu0 0.0
      %867 = vmatpush1.msra.mxu0 0.0
      %868 = vmatprep.subr.mxu0 0.0
      %869 = vmatpush1.msra.mxu0 0.0
      %870 = vmatprep.subr.mxu0 0.0
      %871 = vmatpush1.msra.mxu0 0.0
      %872 = vmatprep.subr.mxu0 0.0
      %873 = vmatpush1.msra.mxu0 %v800
      %874 = vmatprep.subr.mxu0 0.0
      %875 = vmatpush1.msra.mxu0 %v799
      %876 = vmatprep.subr.mxu0 0.0
      %877 = vmatpush1.msra.mxu0 %v798
      %878 = vmatprep.subr.mxu0 0.0
      %879 = vmatpush1.msra.mxu0 %v797
      %880 = vmatprep.subr.mxu0 0.0
      %881 = vmatpush1.msra.mxu0 %v796
      %882 = vmatprep.subr.mxu0 0.0
      %883 = vmatpush1.msra.mxu0 %v795
      %884 = vmatprep.subr.mxu0 0.0
      %885 = vmatpush1.msra.mxu0 %v794
      %886 = vmatprep.subr.mxu0 0.0
      %887 = vmatpush1.msra.mxu0 %v793
      %888 = vmatprep.subr.mxu0 0.0
      %889 = vmatpush2.msra.mxu0 0.0
      %890 = vmatprep.subr.mxu0 0.0
      %891 = vmatpush2.msra.mxu0 0.0
      %892 = vmatprep.subr.mxu0 0.0
      %893 = vmatpush2.msra.mxu0 0.0
      %894 = vmatprep.subr.mxu0 0.0
      %895 = vmatpush2.msra.mxu0 0.0
      %896 = vmatprep.subr.mxu0 0.0
      %897 = vmatpush2.msra.mxu0 0.0
      %898 = vmatprep.subr.mxu0 0.0
      %899 = vmatpush2.msra.mxu0 0.0
      %900 = vmatprep.subr.mxu0 0.0
      %901 = vmatpush2.msra.mxu0 0.0
      %902 = vmatprep.subr.mxu0 0.0
      %903 = vmatpush2.msra.mxu0 0.0
      %904 = vmatprep.subr.mxu0 0.0
      %905 = vmatpush2.msra.mxu0 0.0
      %906 = vmatprep.subr.mxu0 0.0
      %907 = vmatpush2.msra.mxu0 0.0
      %908 = vmatprep.subr.mxu0 0.0
      %909 = vmatpush2.msra.mxu0 0.0
      %910 = vmatprep.subr.mxu0 0.0
      %911 = vmatpush2.msra.mxu0 0.0
      %912 = vmatprep.subr.mxu0 0.0
      %913 = vmatpush2.msra.mxu0 0.0
      %914 = vmatprep.subr.mxu0 0.0
      %915 = vmatpush2.msra.mxu0 0.0
      %916 = vmatprep.subr.mxu0 0.0
      %917 = vmatpush2.msra.mxu0 0.0
      %918 = vmatprep.subr.mxu0 0.0
      %919 = vmatpush2.msra.mxu0 0.0
      %920 = vmatprep.mubr.f32.mxu0 0.0
      %921 = vmatmul.mubr.f32.gmra.mxu0 %v809
      %v922 = vpop.f32.mrf.mxu0
      %v923 = vadd.f32 %v806, %v922
      %v924 = vpop.f32.mrf.mxu0
      %925 = vmatprep.mubr.f32.mxu0 0.0
      %926 = vmatmul.mubr.f32.gmra.mxu0 %v812
      %v927 = vpop.f32.mrf.mxu0
      %v928 = vadd.f32 %v806, %v927
      %v929 = vpop.f32.mrf.mxu0
      %930 = vmatprep.mubr.f32.mxu0 0.0
      %931 = vmatmul.mubr.f32.gmra.mxu0 %v815
      %v932 = vpop.f32.mrf.mxu0
      %v933 = vadd.f32 %v806, %v932
      %v934 = vpop.f32.mrf.mxu0
      %935 = vmatprep.mubr.f32.mxu0 0.0
      %936 = vmatmul.mubr.f32.gmra.mxu0 %v818
      %v937 = vpop.f32.mrf.mxu0
      %v938 = vadd.f32 %v806, %v937
      %v939 = vpop.f32.mrf.mxu0
      %940 = vmatprep.mubr.f32.mxu0 0.0
      %941 = vmatmul.mubr.f32.gmra.mxu0 %v821
      %v942 = vpop.f32.mrf.mxu0
      %v943 = vadd.f32 %v806, %v942
      %v944 = vpop.f32.mrf.mxu0
      %945 = vmatprep.mubr.f32.mxu0 0.0
      %946 = vmatmul.mubr.f32.gmra.mxu0 %v824
      %v947 = vpop.f32.mrf.mxu0
      %v948 = vadd.f32 %v806, %v947
      %v949 = vpop.f32.mrf.mxu0
      %950 = vmatprep.mubr.f32.mxu0 0.0
      %951 = vmatmul.mubr.f32.gmra.mxu0 %v827
      %v952 = vpop.f32.mrf.mxu0
      %v953 = vadd.f32 %v806, %v952
      %v954 = vpop.f32.mrf.mxu0
      %955 = vmatprep.mubr.f32.mxu0 0.0
      %956 = vmatmul.mubr.f32.gmra.mxu0 %v830
      %v957 = vpop.f32.mrf.mxu0
      %v958 = vadd.f32 %v806, %v957
      %v959 = vpop.f32.mrf.mxu0
      %960 = vmatprep.mubr.f32.mxu0 0.0
      %961 = vmatmul.mubr.f32.gmra.mxu0 %v833
      %v962 = vpop.f32.mrf.mxu0
      %v963 = vadd.f32 %v806, %v962
      %v964 = vpop.f32.mrf.mxu0
      %965 = vmatprep.mubr.f32.mxu0 0.0
      %966 = vmatmul.mubr.f32.gmra.mxu0 %v836
      %v967 = vpop.f32.mrf.mxu0
      %v968 = vadd.f32 %v806, %v967
      %v969 = vpop.f32.mrf.mxu0
      %970 = vmatprep.mubr.f32.mxu0 0.0
      %971 = vmatmul.mubr.f32.gmra.mxu0 %v839
      %v972 = vpop.f32.mrf.mxu0
      %v973 = vadd.f32 %v806, %v972
      %v974 = vpop.f32.mrf.mxu0
      %975 = vmatprep.mubr.f32.mxu0 0.0
      %976 = vmatmul.mubr.f32.gmra.mxu0 %v842
      %v977 = vpop.f32.mrf.mxu0
      %v978 = vadd.f32 %v806, %v977
      %v979 = vpop.f32.mrf.mxu0
      %980 = vmatprep.mubr.f32.mxu0 0.0
      %981 = vmatmul.mubr.f32.gmra.mxu0 %v845
      %v982 = vpop.f32.mrf.mxu0
      %v983 = vadd.f32 %v806, %v982
      %v984 = vpop.f32.mrf.mxu0
      %985 = vmatprep.mubr.f32.mxu0 0.0
      %986 = vmatmul.mubr.f32.gmra.mxu0 %v848
      %v987 = vpop.f32.mrf.mxu0
      %v988 = vadd.f32 %v806, %v987
      %v989 = vpop.f32.mrf.mxu0
      %990 = vmatprep.mubr.f32.mxu0 0.0
      %991 = vmatmul.mubr.f32.gmra.mxu0 %v851
      %v992 = vpop.f32.mrf.mxu0
      %v993 = vadd.f32 %v806, %v992
      %v994 = vpop.f32.mrf.mxu0
      %995 = vmatprep.mubr.f32.mxu0 0.0
      %996 = vmatmul.mubr.f32.gmra.mxu0 %v854
      %v997 = vpop.f32.mrf.mxu0
      %v998 = vadd.f32 %v806, %v997
      %v999 = vpop.f32.mrf.mxu0
      %1000 = vdwg.mxu0
      %v1001 = vmul.f32 %v923, 0.2
      %v1002 = vmul.f32 %v928, 0.2
      %v1003 = vmul.f32 %v933, 0.2
      %v1004 = vmul.f32 %v938, 0.2
      %v1005 = vmul.f32 %v943, 0.2
      %v1006 = vmul.f32 %v948, 0.2
      %v1007 = vmul.f32 %v953, 0.2
      %v1008 = vmul.f32 %v958, 0.2
      %v1009 = vmul.f32 %v963, 0.2
      %v1010 = vmul.f32 %v968, 0.2
      %v1011 = vmul.f32 %v973, 0.2
      %v1012 = vmul.f32 %v978, 0.2
      %v1013 = vmul.f32 %v983, 0.2
      %v1014 = vmul.f32 %v988, 0.2
      %v1015 = vmul.f32 %v993, 0.2
      %v1016 = vmul.f32 %v998, 0.2
      %v1017 = vmax.f32 %v923, %v1001
      %v1018 = vmax.f32 %v928, %v1002
      %v1019 = vmax.f32 %v933, %v1003
      %v1020 = vmax.f32 %v938, %v1004
      %v1021 = vmax.f32 %v943, %v1005
      %v1022 = vmax.f32 %v948, %v1006
      %v1023 = vmax.f32 %v953, %v1007
      %v1024 = vmax.f32 %v958, %v1008
      %v1025 = vmax.f32 %v963, %v1009
      %v1026 = vmax.f32 %v968, %v1010
      %v1027 = vmax.f32 %v973, %v1011
      %v1028 = vmax.f32 %v978, %v1012
      %v1029 = vmax.f32 %v983, %v1013
      %v1030 = vmax.f32 %v988, %v1014
      %v1031 = vmax.f32 %v993, %v1015
      %v1032 = vmax.f32 %v998, %v1016
      %v1033 = vld [vmem:[%s7] sm:$0xff]
      %v1034 = vld [vmem:[%s7 + $0x8] sm:$0xff]
      %v1035 = vld [vmem:[%s7 + $0x10] sm:$0xff]
      %v1036 = vld [vmem:[%s7 + $0x18] sm:$0xff]
      %v1037 = vld [vmem:[%s8] sm:$0x1]
      %v1039 = vlaneseq
      %v1040 = vshrl.u32 %v1039, 7
      %v1041 = vsub.s32 0, %v1040
      %v1042 = vrot.slane %v1037, %v1041
      %vm1044 = vcmask 261120
      %v1046 = vsel %vm1044, %v1017, 0
      %v1049 = vsel %vm1044, %v1018, 0
      %v1052 = vsel %vm1044, %v1019, 0
      %v1055 = vsel %vm1044, %v1020, 0
      %v1058 = vsel %vm1044, %v1021, 0
      %v1061 = vsel %vm1044, %v1022, 0
      %v1064 = vsel %vm1044, %v1023, 0
      %v1067 = vsel %vm1044, %v1024, 0
      %v1070 = vsel %vm1044, %v1025, 0
      %v1073 = vsel %vm1044, %v1026, 0
      %v1076 = vsel %vm1044, %v1027, 0
      %v1079 = vsel %vm1044, %v1028, 0
      %v1082 = vsel %vm1044, %v1029, 0
      %v1085 = vsel %vm1044, %v1030, 0
      %v1088 = vsel %vm1044, %v1031, 0
      %v1091 = vsel %vm1044, %v1032, 0
      %1093 = vmatprep.subr.mxu0 0.0
      %1094 = vmatpush1.msra.mxu0 0.0
      %1095 = vmatprep.subr.mxu0 0.0
      %1096 = vmatpush1.msra.mxu0 0.0
      %1097 = vmatprep.subr.mxu0 0.0
      %1098 = vmatpush1.msra.mxu0 0.0
      %1099 = vmatprep.subr.mxu0 0.0
      %1100 = vmatpush1.msra.mxu0 0.0
      %1101 = vmatprep.subr.mxu0 0.0
      %1102 = vmatpush1.msra.mxu0 0.0
      %1103 = vmatprep.subr.mxu0 0.0
      %1104 = vmatpush1.msra.mxu0 0.0
      %1105 = vmatprep.subr.mxu0 0.0
      %1106 = vmatpush1.msra.mxu0 0.0
      %1107 = vmatprep.subr.mxu0 0.0
      %1108 = vmatpush1.msra.mxu0 0.0
      %1109 = vmatprep.subr.mxu0 0.0
      %1110 = vmatpush1.msra.mxu0 0.0
      %1111 = vmatprep.subr.mxu0 0.0
      %1112 = vmatpush1.msra.mxu0 0.0
      %1113 = vmatprep.subr.mxu0 0.0
      %1114 = vmatpush1.msra.mxu0 0.0
      %1115 = vmatprep.subr.mxu0 0.0
      %1116 = vmatpush1.msra.mxu0 0.0
      %1117 = vmatprep.subr.mxu0 0.0
      %1118 = vmatpush1.msra.mxu0 %v1036
      %1119 = vmatprep.subr.mxu0 0.0
      %1120 = vmatpush1.msra.mxu0 %v1035
      %1121 = vmatprep.subr.mxu0 0.0
      %1122 = vmatpush1.msra.mxu0 %v1034
      %1123 = vmatprep.subr.mxu0 0.0
      %1124 = vmatpush1.msra.mxu0 %v1033
      %1125 = vmatprep.subr.mxu0 0.0
      %1126 = vmatpush2.msra.mxu0 0.0
      %1127 = vmatprep.subr.mxu0 0.0
      %1128 = vmatpush2.msra.mxu0 0.0
      %1129 = vmatprep.subr.mxu0 0.0
      %1130 = vmatpush2.msra.mxu0 0.0
      %1131 = vmatprep.subr.mxu0 0.0
      %1132 = vmatpush2.msra.mxu0 0.0
      %1133 = vmatprep.subr.mxu0 0.0
      %1134 = vmatpush2.msra.mxu0 0.0
      %1135 = vmatprep.subr.mxu0 0.0
      %1136 = vmatpush2.msra.mxu0 0.0
      %1137 = vmatprep.subr.mxu0 0.0
      %1138 = vmatpush2.msra.mxu0 0.0
      %1139 = vmatprep.subr.mxu0 0.0
      %1140 = vmatpush2.msra.mxu0 0.0
      %1141 = vmatprep.subr.mxu0 0.0
      %1142 = vmatpush2.msra.mxu0 0.0
      %1143 = vmatprep.subr.mxu0 0.0
      %1144 = vmatpush2.msra.mxu0 0.0
      %1145 = vmatprep.subr.mxu0 0.0
      %1146 = vmatpush2.msra.mxu0 0.0
      %1147 = vmatprep.subr.mxu0 0.0
      %1148 = vmatpush2.msra.mxu0 0.0
      %1149 = vmatprep.subr.mxu0 0.0
      %1150 = vmatpush2.msra.mxu0 0.0
      %1151 = vmatprep.subr.mxu0 0.0
      %1152 = vmatpush2.msra.mxu0 0.0
      %1153 = vmatprep.subr.mxu0 0.0
      %1154 = vmatpush2.msra.mxu0 0.0
      %1155 = vmatprep.subr.mxu0 0.0
      %1156 = vmatpush2.msra.mxu0 0.0
      %1157 = vmatprep.mubr.f32.mxu0 0.0
      %1158 = vmatmul.mubr.f32.gmra.mxu0 %v1046
      %v1159 = vpop.f32.mrf.mxu0
      %v1160 = vadd.f32 %v1042, %v1159
      %v1161 = vpop.f32.mrf.mxu0
      %1162 = vmatprep.mubr.f32.mxu0 0.0
      %1163 = vmatmul.mubr.f32.gmra.mxu0 %v1049
      %v1164 = vpop.f32.mrf.mxu0
      %v1165 = vadd.f32 %v1042, %v1164
      %v1166 = vpop.f32.mrf.mxu0
      %1167 = vmatprep.mubr.f32.mxu0 0.0
      %1168 = vmatmul.mubr.f32.gmra.mxu0 %v1052
      %v1169 = vpop.f32.mrf.mxu0
      %v1170 = vadd.f32 %v1042, %v1169
      %v1171 = vpop.f32.mrf.mxu0
      %1172 = vmatprep.mubr.f32.mxu0 0.0
      %1173 = vmatmul.mubr.f32.gmra.mxu0 %v1055
      %v1174 = vpop.f32.mrf.mxu0
      %v1175 = vadd.f32 %v1042, %v1174
      %v1176 = vpop.f32.mrf.mxu0
      %1177 = vmatprep.mubr.f32.mxu0 0.0
      %1178 = vmatmul.mubr.f32.gmra.mxu0 %v1058
      %v1179 = vpop.f32.mrf.mxu0
      %v1180 = vadd.f32 %v1042, %v1179
      %v1181 = vpop.f32.mrf.mxu0
      %1182 = vmatprep.mubr.f32.mxu0 0.0
      %1183 = vmatmul.mubr.f32.gmra.mxu0 %v1061
      %v1184 = vpop.f32.mrf.mxu0
      %v1185 = vadd.f32 %v1042, %v1184
      %v1186 = vpop.f32.mrf.mxu0
      %1187 = vmatprep.mubr.f32.mxu0 0.0
      %1188 = vmatmul.mubr.f32.gmra.mxu0 %v1064
      %v1189 = vpop.f32.mrf.mxu0
      %v1190 = vadd.f32 %v1042, %v1189
      %v1191 = vpop.f32.mrf.mxu0
      %1192 = vmatprep.mubr.f32.mxu0 0.0
      %1193 = vmatmul.mubr.f32.gmra.mxu0 %v1067
      %v1194 = vpop.f32.mrf.mxu0
      %v1195 = vadd.f32 %v1042, %v1194
      %v1196 = vpop.f32.mrf.mxu0
      %1197 = vmatprep.mubr.f32.mxu0 0.0
      %1198 = vmatmul.mubr.f32.gmra.mxu0 %v1070
      %v1199 = vpop.f32.mrf.mxu0
      %v1200 = vadd.f32 %v1042, %v1199
      %v1201 = vpop.f32.mrf.mxu0
      %1202 = vmatprep.mubr.f32.mxu0 0.0
      %1203 = vmatmul.mubr.f32.gmra.mxu0 %v1073
      %v1204 = vpop.f32.mrf.mxu0
      %v1205 = vadd.f32 %v1042, %v1204
      %v1206 = vpop.f32.mrf.mxu0
      %1207 = vmatprep.mubr.f32.mxu0 0.0
      %1208 = vmatmul.mubr.f32.gmra.mxu0 %v1076
      %v1209 = vpop.f32.mrf.mxu0
      %v1210 = vadd.f32 %v1042, %v1209
      %v1211 = vpop.f32.mrf.mxu0
      %1212 = vmatprep.mubr.f32.mxu0 0.0
      %1213 = vmatmul.mubr.f32.gmra.mxu0 %v1079
      %v1214 = vpop.f32.mrf.mxu0
      %v1215 = vadd.f32 %v1042, %v1214
      %v1216 = vpop.f32.mrf.mxu0
      %1217 = vmatprep.mubr.f32.mxu0 0.0
      %1218 = vmatmul.mubr.f32.gmra.mxu0 %v1082
      %v1219 = vpop.f32.mrf.mxu0
      %v1220 = vadd.f32 %v1042, %v1219
      %v1221 = vpop.f32.mrf.mxu0
      %1222 = vmatprep.mubr.f32.mxu0 0.0
      %1223 = vmatmul.mubr.f32.gmra.mxu0 %v1085
      %v1224 = vpop.f32.mrf.mxu0
      %v1225 = vadd.f32 %v1042, %v1224
      %v1226 = vpop.f32.mrf.mxu0
      %1227 = vmatprep.mubr.f32.mxu0 0.0
      %1228 = vmatmul.mubr.f32.gmra.mxu0 %v1088
      %v1229 = vpop.f32.mrf.mxu0
      %v1230 = vadd.f32 %v1042, %v1229
      %v1231 = vpop.f32.mrf.mxu0
      %1232 = vmatprep.mubr.f32.mxu0 0.0
      %1233 = vmatmul.mubr.f32.gmra.mxu0 %v1091
      %v1234 = vpop.f32.mrf.mxu0
      %v1235 = vadd.f32 %v1042, %v1234
      %v1236 = vpop.f32.mrf.mxu0
      %1237 = vdwg.mxu0
      %vm1238 = vcmask 130048
      %1239 = vst.msk [vmem:[%s334] sm:$0xff] %vm1238, %v1160
      %1240 = vst.msk [vmem:[%s334 + $0x8] sm:$0xff] %vm1238, %v1165
      %1241 = vst.msk [vmem:[%s334 + $0x10] sm:$0xff] %vm1238, %v1170
      %1242 = vst.msk [vmem:[%s334 + $0x18] sm:$0xff] %vm1238, %v1175
      %1243 = vst.msk [vmem:[%s334 + $0x20] sm:$0xff] %vm1238, %v1180
      %1244 = vst.msk [vmem:[%s334 + $0x28] sm:$0xff] %vm1238, %v1185
      %1245 = vst.msk [vmem:[%s334 + $0x30] sm:$0xff] %vm1238, %v1190
      %1246 = vst.msk [vmem:[%s334 + $0x38] sm:$0xff] %vm1238, %v1195
      %1247 = vst.msk [vmem:[%s334 + $0x40] sm:$0xff] %vm1238, %v1200
      %1248 = vst.msk [vmem:[%s334 + $0x48] sm:$0xff] %vm1238, %v1205
      %1249 = vst.msk [vmem:[%s334 + $0x50] sm:$0xff] %vm1238, %v1210
      %1250 = vst.msk [vmem:[%s334 + $0x58] sm:$0xff] %vm1238, %v1215
      %1251 = vst.msk [vmem:[%s334 + $0x60] sm:$0xff] %vm1238, %v1220
      %1252 = vst.msk [vmem:[%s334 + $0x68] sm:$0xff] %vm1238, %v1225
      %1253 = vst.msk [vmem:[%s334 + $0x70] sm:$0xff] %vm1238, %v1230
      %1254 = vst.msk [vmem:[%s334 + $0x78] sm:$0xff] %vm1238, %v1235
      %s1255 = smul.u32 16, %s20
      %p1256 = scmp.lt.s32.totalorder %s1255, 31
      %s1257 = scalar_select %p1256, %s1255, 31
      %s1258 = smul.addr %s1257, 8
      %s1259 = scalar_lea.vmem %s9, %s1258
      // Predicated region
      $region57: #{tpu_custom_call.1} parent=55 // pred_check
        %p1260 = pneg %p232
      $region58: #{tpu_custom_call.1} parent=55 // pred_check_branch
        %1262 = sbr.rel (%p1260) target = $region60
      $region59: #{tpu_custom_call.1} parent=55 // pred_region
        %s1263 = smul.u32 16, %s20
      $region60: #{tpu_custom_call.1} parent=55 // pred_fallthru
        _
    $region56: #{tpu_custom_call.1} parent=5 // pred_fallthru
      _
    %p1264 = scmp.le.s32.totalorder 2, %s15
    // Predicated region
    $region61: #{tpu_custom_call.1} parent=5 // pred_check
      %p1265 = pneg %p1264
    $region62: #{tpu_custom_call.1} parent=5 // pred_check_branch
      %1267 = sbr.rel (%p1265) target = $region64
    $region63: #{tpu_custom_call.1} parent=5 // pred_region
      %s1268 = ssub.s32 %s15, 2
      // Predicated region
      $region65: #{tpu_custom_call.1} parent=63 // pred_check
        %p1269 = pneg %p238
      $region66: #{tpu_custom_call.1} parent=63 // pred_check_branch
        %1271 = sbr.rel (%p1269) target = $region68
      $region67: #{tpu_custom_call.1} parent=63 // pred_region
        %s1272 = smul.u32 16, %s21
        %p1273 = scmp.lt.s32.totalorder %s1272, 31
        %s1274 = scalar_select %p1273, %s1272, 31
        %s1275 = smul.addr %s1274, 8
        %s1276 = scalar_lea.vmem %s9, %s1275
      $region68: #{tpu_custom_call.1} parent=63 // pred_fallthru
        _
    $region64: #{tpu_custom_call.1} parent=5 // pred_fallthru
      _
  $region6: #{tpu_custom_call.1} parent=0 // loop_footer
    %s19 = sadd.s32 1, %s15
  $region7: #{tpu_custom_call.1} parent=0 // loop_footer_branch
    %14 = sbr.rel target = $region3
  $region8: #{tpu_custom_call.1} parent=0 // loop_exit
    _

</llo_original>
